<compile_context>
chip_gen: v5e
topology: v5e:2x2
jax: 0.10.0
libtpu: 0.0.40
codegen_flags: <defaults>
</compile_context>

<pallas_src>
import functools
import math

import jax
import jax.numpy as jnp
from jax.experimental import pallas as pl
from jax.experimental.pallas import tpu as pltpu

LANES = 128


# ---------------------------------------------------------------------------
# Kernel
# ---------------------------------------------------------------------------
def _gru_linear_kernel(x_ref, p_ref, out_ref, *, I, H,
                       r_b0, r_wih1, r_b1, r_wlin, r_blin):
    """x_ref: (B, I) f32; p_ref: (RP, 128) packed params; out_ref: (B, 128) f32."""
    x = x_ref[...]            # (B, I)
    p = p_ref[...]            # (RP, 128)

    def gru_step_zero_h(inp, w_rows, b_row):
        # Single GRU timestep with previous hidden state == 0.
        #   gates layout in lanes: [0:H]=r, [H:2H]=z, [2H:3H]=n
        #   bias row layout:       [0:H]=b_ih_r+b_hh_r, [H:2H]=b_ih_z+b_hh_z,
        #                          [2H:3H]=b_ih_n, [3H:4H]=b_hh_n
        g = jnp.dot(inp, w_rows, preferred_element_type=jnp.float32)   # (B, 128)
        r = jax.nn.sigmoid(g[:, 0:H] + b_row[:, 0:H])
        z = jax.nn.sigmoid(g[:, H:2 * H] + b_row[:, H:2 * H])
        n = jnp.tanh(g[:, 2 * H:3 * H] + b_row[:, 2 * H:3 * H]
                     + r * b_row[:, 3 * H:4 * H])
        return (1.0 - z) * n          # + z * h_prev, but h_prev == 0

    # Layer 0: (B, I) @ (I, 3H)   (weights live in lanes 0:3H of rows 0:I)
    h1 = gru_step_zero_h(x, p[0:I, :], p[r_b0:r_b0 + 1, :])
    # Layer 1: (B, H) @ (H, 3H)
    h2 = gru_step_zero_h(h1, p[r_wih1:r_wih1 + H, :], p[r_b1:r_b1 + 1, :])

    # Final Linear, lane-dense store: (B, H) @ (H, 128) + (1, 128)
    out_ref[...] = (jnp.dot(h2, p[r_wlin:r_wlin + H, :],
                            preferred_element_type=jnp.float32)
                    + p[r_blin:r_blin + 1, :])


# ---------------------------------------------------------------------------
# Wrapper
# ---------------------------------------------------------------------------
def _row_offsets(I, H):
    r_b0 = I
    r_wih1 = I + 1
    r_b1 = I + 1 + H
    r_wlin = I + 2 + H
    r_blin = I + 2 + 2 * H
    n_rows = I + 2 * H + 3
    return r_b0, r_wih1, r_b1, r_wlin, r_blin, n_rows


def mygru_forward(x, packed, *, input_size, hidden_size, output_size):
    """x: (B, input_size) f32, packed: (RP, 128) f32 -> (B, 1, output_size) f32."""
    B = x.shape[0]
    I, H, O = input_size, hidden_size, output_size
    r_b0, r_wih1, r_b1, r_wlin, r_blin, _ = _row_offsets(I, H)

    kernel = functools.partial(
        _gru_linear_kernel, I=I, H=H,
        r_b0=r_b0, r_wih1=r_wih1, r_b1=r_b1, r_wlin=r_wlin, r_blin=r_blin)

    vmem = pl.BlockSpec(memory_space=pltpu.MemorySpace.VMEM)
    out_padded = pl.pallas_call(
        kernel,
        out_shape=jax.ShapeDtypeStruct((B, LANES), jnp.float32),
        in_specs=[vmem, vmem],
        out_specs=vmem,
    )(x, packed)

    # Match PyTorch `pred` shape: (B, seq_len=1, output_size).
    return out_padded[:, :O].reshape(B, 1, O)


# ---------------------------------------------------------------------------
# Parameters (PyTorch GRU/Linear layout) + host-side packing
# ---------------------------------------------------------------------------
def init_torch_style_params(key, input_size=20, hidden_size=3, output_size=20):
    """Deterministic params in torch layout: weight_ih_l* (3H, in), gate order [r,z,n]."""
    I, H, O = input_size, hidden_size, output_size
    bound = 1.0 / math.sqrt(H)

    def u(kk, shape):
        return jax.random.uniform(kk, shape, jnp.float32, -bound, bound)

    ks = jax.random.split(key, 10)
    return {
        "w_ih_l0": u(ks[0], (3 * H, I)),
        "w_hh_l0": u(ks[1], (3 * H, H)),
        "b_ih_l0": u(ks[2], (3 * H,)),
        "b_hh_l0": u(ks[3], (3 * H,)),
        "w_ih_l1": u(ks[4], (3 * H, H)),
        "w_hh_l1": u(ks[5], (3 * H, H)),
        "b_ih_l1": u(ks[6], (3 * H,)),
        "b_hh_l1": u(ks[7], (3 * H,)),
        "w_lin":   u(ks[8], (O, H)),
        "b_lin":   u(ks[9], (O,)),
    }


def pack_params(tp, *, input_size, hidden_size, output_size):
    """Pack all weights/biases into one (rows_padded, 128) f32 slab.

    Row layout (r,z,n gate order, concatenated along lanes):
      [0:I)              w_ih_l0^T      lanes [0:3H)
      [I]                bias0          lanes [0:2H)=b_ih+b_hh (r,z), [2H:3H)=b_ih_n, [3H:4H)=b_hh_n
      [I+1 : I+1+H)      w_ih_l1^T      lanes [0:3H)
      [I+1+H]            bias1          same layout as bias0
      [I+2+H : I+2+2H)   w_lin^T        lanes [0:O)
      [I+2+2H]           b_lin          lanes [0:O)
    Note: w_hh_l0 / w_hh_l1 are intentionally NOT packed — with seq_len=1 and
    h_0 == 0 they never contribute to the forward pass.
    """
    I, H, O = input_size, hidden_size, output_size
    assert 4 * H <= LANES and 3 * H <= LANES and O <= LANES and I <= LANES
    r_b0, r_wih1, r_b1, r_wlin, r_blin, n_rows = _row_offsets(I, H)
    rows_padded = ((n_rows + 7) // 8) * 8

    def bias_row(b_ih, b_hh):
        return jnp.concatenate([
            b_ih[:2 * H] + b_hh[:2 * H],   # r, z biases pre-summed
            b_ih[2 * H:],                  # b_ih_n
            b_hh[2 * H:],                  # b_hh_n (multiplied by r in-kernel)
        ])                                  # (4H,)

    slab = jnp.zeros((rows_padded, LANES), jnp.float32)
    slab = slab.at[0:I, 0:3 * H].set(tp["w_ih_l0"].T)
    slab = slab.at[r_b0, 0:4 * H].set(bias_row(tp["b_ih_l0"], tp["b_hh_l0"]))
    slab = slab.at[r_wih1:r_wih1 + H, 0:3 * H].set(tp["w_ih_l1"].T)
    slab = slab.at[r_b1, 0:4 * H].set(bias_row(tp["b_ih_l1"], tp["b_hh_l1"]))
    slab = slab.at[r_wlin:r_wlin + H, 0:O].set(tp["w_lin"].T)
    slab = slab.at[r_blin, 0:O].set(tp["b_lin"])
    return slab


# ---------------------------------------------------------------------------
# Pure-JAX reference (full PyTorch GRU semantics, including the dead W_hh terms)
# ---------------------------------------------------------------------------
def _reference_forward(x, tp, hidden_size):
    B = x.shape[0]
    H = hidden_size

    def cell(inp, h, w_ih, w_hh, b_ih, b_hh):
        gi = inp @ w_ih.T + b_ih
        gh = h @ w_hh.T + b_hh
        i_r, i_z, i_n = jnp.split(gi, 3, axis=1)
        h_r, h_z, h_n = jnp.split(gh, 3, axis=1)
        r = jax.nn.sigmoid(i_r + h_r)
        z = jax.nn.sigmoid(i_z + h_z)
        n = jnp.tanh(i_n + r * h_n)
        return (1.0 - z) * n + z * h

    h0 = jnp.zeros((B, H), jnp.float32)
    h1 = cell(x, h0, tp["w_ih_l0"], tp["w_hh_l0"], tp["b_ih_l0"], tp["b_hh_l0"])
    h2 = cell(h1, h0, tp["w_ih_l1"], tp["w_hh_l1"], tp["b_ih_l1"], tp["b_hh_l1"])
    out = h2 @ tp["w_lin"].T + tp["b_lin"]
    return out.reshape(B, 1, -1)


# ---------------------------------------------------------------------------
if __name__ == "__main__":
    INPUT_SIZE = 20    # module default inputs_size=20
    HIDDEN_SIZE = 3    # module default hidden_layer_size=3
    OUTPUT_SIZE = 20   # module default output_size=20
    BATCH = 8

    key = jax.random.PRNGKey(0)
    pkey, xkey = jax.random.split(key)
    tparams = init_torch_style_params(pkey, INPUT_SIZE, HIDDEN_SIZE, OUTPUT_SIZE)
    packed = pack_params(tparams, input_size=INPUT_SIZE,
                         hidden_size=HIDDEN_SIZE, output_size=OUTPUT_SIZE)

    x = jax.random.normal(xkey, (BATCH, INPUT_SIZE), dtype=jnp.float32)

    pred = mygru_forward(x, packed, input_size=INPUT_SIZE,
                         hidden_size=HIDDEN_SIZE, output_size=OUTPUT_SIZE)
    jax.block_until_ready(pred)

    assert pred.shape == (BATCH, 1, OUTPUT_SIZE), pred.shape
    assert pred.dtype == jnp.float32

    ref = _reference_forward(x, tparams, HIDDEN_SIZE)
    max_err = float(jnp.max(jnp.abs(pred - ref)))
    assert max_err < 1e-3, f"mismatch vs reference: max |err| = {max_err}"

    print("KERNEL_OK")
</pallas_src>

<mosaic_0001>
module attributes {stable_mosaic.version = 11 : i64} {
  func.func @_gru_linear_kernel(%arg0: memref<8x20xf32, #tpu.memory_space<vmem>>, %arg1: memref<32x128xf32, #tpu.memory_space<vmem>>, %arg2: memref<8x128xf32, #tpu.memory_space<vmem>>) attributes {dimension_semantics = [], scalar_prefetch = 0 : i64, scratch_operands = 0 : i64, tpu.core_type = #tpu.core_type<tc>} {
    %c0 = arith.constant 0 : index
    %c0_0 = arith.constant 0 : index
    %0 = vector.load %arg0[%c0, %c0_0] : memref<8x20xf32, #tpu.memory_space<vmem>>, vector<8x20xf32>
    %c0_1 = arith.constant 0 : index
    %c0_2 = arith.constant 0 : index
    %1 = vector.load %arg1[%c0_1, %c0_2] : memref<32x128xf32, #tpu.memory_space<vmem>>, vector<32x128xf32>
    %2 = vector.extract_strided_slice %1 {offsets = [0, 0], sizes = [20, 128], strides = [1, 1]} : vector<32x128xf32> to vector<20x128xf32>
    %3 = vector.extract_strided_slice %1 {offsets = [20, 0], sizes = [1, 128], strides = [1, 1]} : vector<32x128xf32> to vector<1x128xf32>
    %cst = arith.constant dense<0.000000e+00> : vector<8x128xf32>
    %4 = tpu.matmul %0, %2, %cst {dimension_numbers = #tpu.dot_dimension_numbers<[1], [0], [0], [1], [0, 0, 1, 1], [], []>} : vector<8x20xf32>, vector<20x128xf32>, vector<8x128xf32> -> vector<8x128xf32>
    %5 = vector.extract_strided_slice %4 {offsets = [0, 0], sizes = [8, 3], strides = [1, 1]} : vector<8x128xf32> to vector<8x3xf32>
    %6 = vector.extract_strided_slice %3 {offsets = [0, 0], sizes = [1, 3], strides = [1, 1]} : vector<1x128xf32> to vector<1x3xf32>
    %7 = vector.broadcast %6 : vector<1x3xf32> to vector<8x3xf32>
    %8 = arith.addf %5, %7 : vector<8x3xf32>
    %9 = arith.negf %8 : vector<8x3xf32>
    %10 = math.exp %9 : vector<8x3xf32>
    %cst_3 = arith.constant 1.000000e+00 : f32
    %11 = vector.broadcast %cst_3 : f32 to vector<8x3xf32>
    %12 = arith.addf %11, %10 : vector<8x3xf32>
    %13 = arith.divf %11, %12 : vector<8x3xf32>
    %14 = vector.extract_strided_slice %4 {offsets = [0, 3], sizes = [8, 3], strides = [1, 1]} : vector<8x128xf32> to vector<8x3xf32>
    %15 = vector.extract_strided_slice %3 {offsets = [0, 3], sizes = [1, 3], strides = [1, 1]} : vector<1x128xf32> to vector<1x3xf32>
    %16 = vector.broadcast %15 : vector<1x3xf32> to vector<8x3xf32>
    %17 = arith.addf %14, %16 : vector<8x3xf32>
    %18 = arith.negf %17 : vector<8x3xf32>
    %19 = math.exp %18 : vector<8x3xf32>
    %cst_4 = arith.constant 1.000000e+00 : f32
    %20 = vector.broadcast %cst_4 : f32 to vector<8x3xf32>
    %21 = arith.addf %20, %19 : vector<8x3xf32>
    %22 = arith.divf %20, %21 : vector<8x3xf32>
    %23 = vector.extract_strided_slice %4 {offsets = [0, 6], sizes = [8, 3], strides = [1, 1]} : vector<8x128xf32> to vector<8x3xf32>
    %24 = vector.extract_strided_slice %3 {offsets = [0, 6], sizes = [1, 3], strides = [1, 1]} : vector<1x128xf32> to vector<1x3xf32>
    %25 = vector.broadcast %24 : vector<1x3xf32> to vector<8x3xf32>
    %26 = arith.addf %23, %25 : vector<8x3xf32>
    %27 = vector.extract_strided_slice %3 {offsets = [0, 9], sizes = [1, 3], strides = [1, 1]} : vector<1x128xf32> to vector<1x3xf32>
    %28 = vector.broadcast %27 : vector<1x3xf32> to vector<8x3xf32>
    %29 = arith.mulf %13, %28 : vector<8x3xf32>
    %30 = arith.addf %26, %29 : vector<8x3xf32>
    %31 = math.tanh %30 : vector<8x3xf32>
    %cst_5 = arith.constant 1.000000e+00 : f32
    %32 = vector.broadcast %cst_5 : f32 to vector<8x3xf32>
    %33 = arith.subf %32, %22 : vector<8x3xf32>
    %34 = arith.mulf %33, %31 : vector<8x3xf32>
    %35 = vector.extract_strided_slice %1 {offsets = [21, 0], sizes = [3, 128], strides = [1, 1]} : vector<32x128xf32> to vector<3x128xf32>
    %36 = vector.extract_strided_slice %1 {offsets = [24, 0], sizes = [1, 128], strides = [1, 1]} : vector<32x128xf32> to vector<1x128xf32>
    %cst_6 = arith.constant dense<0.000000e+00> : vector<8x128xf32>
    %37 = tpu.matmul %34, %35, %cst_6 {dimension_numbers = #tpu.dot_dimension_numbers<[1], [0], [0], [1], [0, 0, 1, 1], [], []>} : vector<8x3xf32>, vector<3x128xf32>, vector<8x128xf32> -> vector<8x128xf32>
    %38 = vector.extract_strided_slice %37 {offsets = [0, 0], sizes = [8, 3], strides = [1, 1]} : vector<8x128xf32> to vector<8x3xf32>
    %39 = vector.extract_strided_slice %36 {offsets = [0, 0], sizes = [1, 3], strides = [1, 1]} : vector<1x128xf32> to vector<1x3xf32>
    %40 = vector.broadcast %39 : vector<1x3xf32> to vector<8x3xf32>
    %41 = arith.addf %38, %40 : vector<8x3xf32>
    %42 = arith.negf %41 : vector<8x3xf32>
    %43 = math.exp %42 : vector<8x3xf32>
    %cst_7 = arith.constant 1.000000e+00 : f32
    %44 = vector.broadcast %cst_7 : f32 to vector<8x3xf32>
    %45 = arith.addf %44, %43 : vector<8x3xf32>
    %46 = arith.divf %44, %45 : vector<8x3xf32>
    %47 = vector.extract_strided_slice %37 {offsets = [0, 3], sizes = [8, 3], strides = [1, 1]} : vector<8x128xf32> to vector<8x3xf32>
    %48 = vector.extract_strided_slice %36 {offsets = [0, 3], sizes = [1, 3], strides = [1, 1]} : vector<1x128xf32> to vector<1x3xf32>
    %49 = vector.broadcast %48 : vector<1x3xf32> to vector<8x3xf32>
    %50 = arith.addf %47, %49 : vector<8x3xf32>
    %51 = arith.negf %50 : vector<8x3xf32>
    %52 = math.exp %51 : vector<8x3xf32>
    %cst_8 = arith.constant 1.000000e+00 : f32
    %53 = vector.broadcast %cst_8 : f32 to vector<8x3xf32>
    %54 = arith.addf %53, %52 : vector<8x3xf32>
    %55 = arith.divf %53, %54 : vector<8x3xf32>
    %56 = vector.extract_strided_slice %37 {offsets = [0, 6], sizes = [8, 3], strides = [1, 1]} : vector<8x128xf32> to vector<8x3xf32>
    %57 = vector.extract_strided_slice %36 {offsets = [0, 6], sizes = [1, 3], strides = [1, 1]} : vector<1x128xf32> to vector<1x3xf32>
    %58 = vector.broadcast %57 : vector<1x3xf32> to vector<8x3xf32>
    %59 = arith.addf %56, %58 : vector<8x3xf32>
    %60 = vector.extract_strided_slice %36 {offsets = [0, 9], sizes = [1, 3], strides = [1, 1]} : vector<1x128xf32> to vector<1x3xf32>
    %61 = vector.broadcast %60 : vector<1x3xf32> to vector<8x3xf32>
    %62 = arith.mulf %46, %61 : vector<8x3xf32>
    %63 = arith.addf %59, %62 : vector<8x3xf32>
    %64 = math.tanh %63 : vector<8x3xf32>
    %cst_9 = arith.constant 1.000000e+00 : f32
    %65 = vector.broadcast %cst_9 : f32 to vector<8x3xf32>
    %66 = arith.subf %65, %55 : vector<8x3xf32>
    %67 = arith.mulf %66, %64 : vector<8x3xf32>
    %68 = vector.extract_strided_slice %1 {offsets = [25, 0], sizes = [3, 128], strides = [1, 1]} : vector<32x128xf32> to vector<3x128xf32>
    %cst_10 = arith.constant dense<0.000000e+00> : vector<8x128xf32>
    %69 = tpu.matmul %67, %68, %cst_10 {dimension_numbers = #tpu.dot_dimension_numbers<[1], [0], [0], [1], [0, 0, 1, 1], [], []>} : vector<8x3xf32>, vector<3x128xf32>, vector<8x128xf32> -> vector<8x128xf32>
    %70 = vector.extract_strided_slice %1 {offsets = [28, 0], sizes = [1, 128], strides = [1, 1]} : vector<32x128xf32> to vector<1x128xf32>
    %71 = vector.broadcast %70 : vector<1x128xf32> to vector<8x128xf32>
    %72 = arith.addf %69, %71 : vector<8x128xf32>
    %c0_11 = arith.constant 0 : index
    %c0_12 = arith.constant 0 : index
    %73 = vector.load %arg2[%c0_11, %c0_12] : memref<8x128xf32, #tpu.memory_space<vmem>>, vector<8x128xf32>
    tpu.vector_store %arg2[%c0_11, %c0_12], %72 {strides = array<i32>} : memref<8x128xf32, #tpu.memory_space<vmem>>, vector<8x128xf32>,
    return
  }
}

</mosaic_0001>

<llo_original>
// kernel: tpu_custom_call.1
$region0: #{tpu_custom_call.1}
  #allocation0 [shape = 'u32[]', space=smem, size = 0x4, offset = 0x4, fixed_abs, tag = 'smem constant byte address 0x4 - core index']
  #allocation1 [shape = 'u32[72,128]{1,0:T(1,128)}', space=vmem, size = 0x9000, scoped, tag = 'internal scratch']
  %s0 = inlined_call_operand.hbm [shape: f32[8,20], index: 0, kind: input, shape index: {}]
  %s1 = inlined_call_operand.hbm [shape: f32[32,128], index: 1, kind: input, shape index: {}]
  %s2 = inlined_call_operand.hbm [shape: f32[8,128], index: 2, kind: output, shape index: {}]
  %s3 = sld [smem:[#allocation0]]
  $region26: #{tpu_custom_call.1} parent=0
    _
  %s5 = ssub.s32 1, %s3
  %s6 = scalar_select 0, %s5, %s3
  $region1: #{tpu_custom_call.1} parent=0
    #allocation2 [shape = 'u8[4096]{0}', space=vmem, size = 0x1000, scoped, tag = 'input window, operand 0, single buffered']
    #allocation3 [shape = 's32[1]{0}', space=sflag, size = 0x4, scoped, tag = 'scoped memory for tpu_custom_call.1']
    #allocation4 [shape = 's32[1]{0}', space=sflag, size = 0x4, scoped, tag = 'scoped memory for tpu_custom_call.1']
    #allocation5 [shape = 'u8[16384]{0}', space=vmem, size = 0x4000, scoped, tag = 'input window, operand 1, single buffered']
    #allocation6 [shape = 's32[1]{0}', space=sflag, size = 0x4, scoped, tag = 'scoped memory for tpu_custom_call.1']
    #allocation7 [shape = 'u8[4096]{0}', space=vmem, size = 0x1000, scoped, tag = 'output window, operand 0, single buffered']
    %7 = vsyncpa [#allocation3], 0
    %8 = vsyncpa [#allocation6], 0
    %9 = vsyncpa [#allocation4], 0
    // Predicated region
    $region2: #{tpu_custom_call.1} parent=1 // pred_check
      _
    $region3: #{tpu_custom_call.1} parent=1 // pred_check_branch
      %11 = sbr.rel (0) target = $region5
    $region4: #{tpu_custom_call.1} parent=1 // pred_region
      %13 = vsyncadd [#allocation3], 0
      %s15 = sshll.u32 %s0, 4
      %s16 = int_to_ptr.hbm [resolvable:$true] %s15
      %s17 = sshll.u32 [#allocation2], 4
      %s18 = int_to_ptr.vmem [resolvable:$true] %s17
      %20 = dma.hbm_to_vmem [thread:$0]  %s16, 128, %s18, [#allocation3]
    $region5: #{tpu_custom_call.1} parent=1 // pred_fallthru
      _
    // Predicated region
    $region6: #{tpu_custom_call.1} parent=1 // pred_check
      _
    $region7: #{tpu_custom_call.1} parent=1 // pred_check_branch
      %22 = sbr.rel (0) target = $region9
    $region8: #{tpu_custom_call.1} parent=1 // pred_region
      %24 = vsyncadd [#allocation6], 0
      %s25 = sshll.u32 %s1, 4
      %s26 = int_to_ptr.hbm [resolvable:$true] %s25
      %s27 = sshll.u32 [#allocation5], 4
      %s28 = int_to_ptr.vmem [resolvable:$true] %s27
      %33 = dma.hbm_to_vmem [thread:$0]  %s26, 512, %s28, [#allocation6], 128, 128, 8
    $region9: #{tpu_custom_call.1} parent=1 // pred_fallthru
      _
    // Predicated region
    $region10: #{tpu_custom_call.1} parent=1 // pred_check
      _
    $region11: #{tpu_custom_call.1} parent=1 // pred_check_branch
      %35 = sbr.rel (0) target = $region13
    $region12: #{tpu_custom_call.1} parent=1 // pred_region
      %37 = dma.done [#allocation3], 128
    $region13: #{tpu_custom_call.1} parent=1 // pred_fallthru
      _
    // Predicated region
    $region14: #{tpu_custom_call.1} parent=1 // pred_check
      _
    $region15: #{tpu_custom_call.1} parent=1 // pred_check_branch
      %39 = sbr.rel (0) target = $region17
    $region16: #{tpu_custom_call.1} parent=1 // pred_region
      %41 = dma.done [#allocation6], 512
    $region17: #{tpu_custom_call.1} parent=1 // pred_fallthru
      _
    %v42 = vld [vmem:[#allocation2] sm:$0xff]
    %v43 = vld [vmem:[#allocation5] sm:$0xff]
    %v44 = vld [vmem:[#allocation5 + $0x8] sm:$0xff]
    %v45 = vld [vmem:[#allocation5 + $0x10] sm:$0xff]
    %v46 = vld [vmem:[#allocation5 + $0x18] sm:$0xff]
    %vm47 = vcmask 162816
    %v49 = vsel %vm47, %v42, 0
    %vm51 = vcmask 1043456
    %v53 = vsel %vm51, %v45, 0
    %55 = vmatpush.msra.mxu0 0.0
    %56 = vmatpush.msra.mxu0 0.0
    %57 = vmatpush.msra.mxu0 0.0
    %58 = vmatpush.msra.mxu0 0.0
    %59 = vmatpush.msra.mxu0 0.0
    %60 = vmatpush.msra.mxu0 0.0
    %61 = vmatpush.msra.mxu0 0.0
    %62 = vmatpush.msra.mxu0 0.0
    %63 = vmatpush.msra.mxu0 0.0
    %64 = vmatpush.msra.mxu0 0.0
    %65 = vmatpush.msra.mxu0 0.0
    %66 = vmatpush.msra.mxu0 0.0
    %67 = vmatpush.msra.mxu0 0.0
    %68 = vmatpush.msra.mxu0 %v53
    %69 = vmatpush.msra.mxu0 %v44
    %70 = vmatpush.msra.mxu0 %v43
    %71 = vmatmul.f32.gmra.mxu0 %v49
    %v72 = vpop.f32.mrf.mxu0
    %v73 = vadd.f32 0.0, %v72
    %74 = vdwg.mxu0
    %v75 = vperm.slane %v45, 4
    %v76 = vadd.f32 %v73, %v75
    %v77 = vxor.u32 %v76, 2147483648
    %v78 = vmul.f32 %v77, 1.442695
    %v79 = vpow.pop %v78
    %v80 = vadd.f32 %v79, 1.0
    %v81 = vrcp.pop %v80
    %v82 = vmul.f32 %v80, %v81
    %v83 = vsub.f32 1.0, %v82
    %v84 = vmul.f32 %v81, %v83
    %v85 = vadd.f32 %v81, %v84
    %vm86 = vweird.f32 %v80
    %vm87 = vweird.f32 %v81
    %vm88 = vmor %vm86, %vm87
    %v89 = vsel %vm88, %v81, %v85
    %v90 = vand.u32 2147483647, %v80
    %vm91 = vcmp.eq.f32.partialorder %v90, 8.507059e+37
    %v92 = vand.u32 %v80, 2147483648
    %v93 = vor.u32 1.1754944e-38, %v92
    %v94 = vsel %vm91, %v93, %v89
    %v95 = vmul.f32 1.0, %v94
    %97 = vrot.lane.b32.xlu0 %v75, 119
    %v98 = vpop.permute.xlu0 %97
    %v100 = vmul.f32 %v95, %v98
    %102 = vrot.lane.b32.xlu0 %v100, 6
    %v103 = vpop.permute.xlu0 %102
    %v105 = vadd.f32 %v76, %v103
    %v106 = vtanh.pop %v105
    %v107 = vsub.f32 1.0, %v95
    %109 = vrot.lane.b32.xlu0 %v106, 125
    %v110 = vpop.permute.xlu0 %109
    %v112 = vmul.f32 %v107, %v110
    %114 = vrot.lane.b32.xlu0 %v112, 125
    %v115 = vpop.permute.xlu0 %114
    %v116 = vrot.slane %v45, 5
    %vm117 = vcmask 23552
    %v118 = vsel %vm117, %v115, 0
    %vm120 = vcmask 1042432
    %v121 = vsel %vm120, %v116, 0
    %123 = vmatpush.msra.mxu0 0.0
    %124 = vmatpush.msra.mxu0 0.0
    %125 = vmatpush.msra.mxu0 0.0
    %126 = vmatpush.msra.mxu0 0.0
    %127 = vmatpush.msra.mxu0 0.0
    %128 = vmatpush.msra.mxu0 0.0
    %129 = vmatpush.msra.mxu0 0.0
    %130 = vmatpush.msra.mxu0 0.0
    %131 = vmatpush.msra.mxu0 0.0
    %132 = vmatpush.msra.mxu0 0.0
    %133 = vmatpush.msra.mxu0 0.0
    %134 = vmatpush.msra.mxu0 0.0
    %135 = vmatpush.msra.mxu0 0.0
    %136 = vmatpush.msra.mxu0 0.0
    %137 = vmatpush.msra.mxu0 0.0
    %138 = vmatpush.msra.mxu0 %v121
    %139 = vmatmul.f32.gmra.mxu0 %v118
    %v140 = vpop.f32.mrf.mxu0
    %v141 = vadd.f32 0.0, %v140
    %142 = vdwg.mxu0
    %v143 = vperm.slane %v46, 0
    %v144 = vadd.f32 %v141, %v143
    %v145 = vxor.u32 %v144, 2147483648
    %v146 = vmul.f32 %v145, 1.442695
    %v147 = vpow.pop %v146
    %v148 = vadd.f32 %v147, 1.0
    %v149 = vrcp.pop %v148
    %v150 = vmul.f32 %v148, %v149
    %v151 = vsub.f32 1.0, %v150
    %v152 = vmul.f32 %v149, %v151
    %v153 = vadd.f32 %v149, %v152
    %vm154 = vweird.f32 %v148
    %vm155 = vweird.f32 %v149
    %vm156 = vmor %vm154, %vm155
    %v157 = vsel %vm156, %v149, %v153
    %v158 = vand.u32 2147483647, %v148
    %vm159 = vcmp.eq.f32.partialorder %v158, 8.507059e+37
    %v160 = vand.u32 %v148, 2147483648
    %v161 = vor.u32 1.1754944e-38, %v160
    %v162 = vsel %vm159, %v161, %v157
    %v163 = vmul.f32 1.0, %v162
    %165 = vrot.lane.b32.xlu0 %v143, 119
    %v166 = vpop.permute.xlu0 %165
    %v168 = vmul.f32 %v163, %v166
    %170 = vrot.lane.b32.xlu0 %v168, 6
    %v171 = vpop.permute.xlu0 %170
    %v173 = vadd.f32 %v144, %v171
    %v174 = vtanh.pop %v173
    %v175 = vsub.f32 1.0, %v163
    %177 = vrot.lane.b32.xlu0 %v174, 125
    %v178 = vpop.permute.xlu0 %177
    %v180 = vmul.f32 %v175, %v178
    %v181 = vperm.slane %v46, 4
    %183 = vrot.lane.b32.xlu0 %v180, 125
    %v184 = vpop.permute.xlu0 %183
    %v186 = vrot.slane %v46, 1
    %v187 = vsel %vm117, %v184, 0
    %v189 = vsel %vm120, %v186, 0
    %191 = vmatpush.msra.mxu0 0.0
    %192 = vmatpush.msra.mxu0 0.0
    %193 = vmatpush.msra.mxu0 0.0
    %194 = vmatpush.msra.mxu0 0.0
    %195 = vmatpush.msra.mxu0 0.0
    %196 = vmatpush.msra.mxu0 0.0
    %197 = vmatpush.msra.mxu0 0.0
    %198 = vmatpush.msra.mxu0 0.0
    %199 = vmatpush.msra.mxu0 0.0
    %200 = vmatpush.msra.mxu0 0.0
    %201 = vmatpush.msra.mxu0 0.0
    %202 = vmatpush.msra.mxu0 0.0
    %203 = vmatpush.msra.mxu0 0.0
    %204 = vmatpush.msra.mxu0 0.0
    %205 = vmatpush.msra.mxu0 0.0
    %206 = vmatpush.msra.mxu0 %v189
    %207 = vmatmul.f32.gmra.mxu0 %v187
    %v208 = vpop.f32.mrf.mxu0
    %v209 = vadd.f32 %v181, %v208
    %210 = vdwg.mxu0
    %211 = vst [vmem:[#allocation7] sm:$0xff] %v209
    // Predicated region
    $region18: #{tpu_custom_call.1} parent=1 // pred_check
      _
    $region19: #{tpu_custom_call.1} parent=1 // pred_check_branch
      %213 = sbr.rel (0) target = $region21
    $region20: #{tpu_custom_call.1} parent=1 // pred_region
      %215 = vsyncadd [#allocation4], 0
      %s217 = sshll.u32 [#allocation7], 4
      %s218 = int_to_ptr.vmem [resolvable:$true] %s217
      %s219 = sshll.u32 %s2, 4
      %s220 = int_to_ptr.hbm [resolvable:$true] %s219
      %222 = dma.vmem_to_hbm [thread:$0]  %s218, 128, %s220, [#allocation4]
    $region21: #{tpu_custom_call.1} parent=1 // pred_fallthru
      _
    // Predicated region
    $region22: #{tpu_custom_call.1} parent=1 // pred_check
      _
    $region23: #{tpu_custom_call.1} parent=1 // pred_check_branch
      %224 = sbr.rel (0) target = $region25
    $region24: #{tpu_custom_call.1} parent=1 // pred_region
      %226 = dma.done [#allocation4], 128
    $region25: #{tpu_custom_call.1} parent=1 // pred_fallthru
      _
    %227 = vsyncpa [#allocation3], 1
    %228 = vsyncpa [#allocation6], 1
    %229 = vsyncpa [#allocation4], 1

</llo_original>
